<compile_context>
chip_gen: v5e
topology: v5e:2x2
jax: 0.10.0
libtpu: 0.0.40
codegen_flags: <defaults>
</compile_context>

<pallas_src>
import functools
import math

import jax
import jax.numpy as jnp
from jax.experimental import pallas as pl
from jax.experimental.pallas import tpu as pltpu


LOG_2PI = math.log(2.0 * math.pi)


def _softplus(z):
    # Numerically-stable softplus (matches torch.nn.Softplus default).
    return jnp.maximum(z, 0.0) + jnp.log1p(jnp.exp(-jnp.abs(z)))


def _round_up(n, m):
    return ((n + m - 1) // m) * m


def _pick_tile(batch, tb_max=512):
    # Multiple of 8 sublanes, capped at tb_max, and >= 2 grid steps when the
    # batch allows it (so megacore/v7x shards the "parallel" axis over both TCs).
    half = -(-batch // 2)  # ceil(batch / 2)
    return min(tb_max, _round_up(max(half, 8), 8))


# ----------------------------- kernel bodies --------------------------------

def _forward_tile(xt_ref, w_ref, b_ref, d_in, k):
    """Compute one (tb, 3K) tile: [logits | loc | scale]."""
    xt = xt_ref[...]                                  # (tb, d_in + 1)
    t = xt[:, d_in:d_in + 1].astype(jnp.float32)      # (tb, 1) treatment column
    # Single fused MXU matmul over all six heads; the W row corresponding to
    # the treatment column is zero so feeding the full (x, t) tile is exact.
    h = jnp.dot(xt, w_ref[...], preferred_element_type=jnp.float32) + b_ref[...]
    h0 = h[:, :3 * k]                                 # [pi0 | mu0 | s0]
    h1 = h[:, 3 * k:]                                 # [pi1 | mu1 | s1]
    lane = jax.lax.broadcasted_iota(jnp.int32, (1, 3 * k), 1)
    is_scale = lane >= 2 * k                          # softplus only on scale lanes
    g0 = jnp.where(is_scale, _softplus(h0), h0)
    g1 = jnp.where(is_scale, _softplus(h1), h1)
    return (1.0 - t) * g0 + t * g1 + jnp.where(is_scale, 1e-7, 0.0)


def split_gmm_fwd_kernel(xt_ref, w_ref, b_ref, out_ref, *, d_in, k):
    out_ref[...] = _forward_tile(xt_ref, w_ref, b_ref, d_in, k)


def split_gmm_logp_kernel(xt_ref, y_ref, w_ref, b_ref, out_ref, *, d_in, k):
    # Fused forward + MixtureSameFamily.log_prob (as overridden in the module):
    #   log( sum_k exp(Normal(loc,scale).log_prob(y)) * softmax(logits) + 1e-7 )
    comb = _forward_tile(xt_ref, w_ref, b_ref, d_in, k)
    logits = comb[:, :k]
    loc = comb[:, k:2 * k]
    scale = comb[:, 2 * k:]
    y = y_ref[...]                                    # (tb, 1)

    z = (y - loc) / scale
    log_norm = -0.5 * z * z - jnp.log(scale) - 0.5 * LOG_2PI
    m = jnp.max(logits, axis=-1, keepdims=True)
    e = jnp.exp(logits - m)
    probs = e / jnp.sum(e, axis=-1, keepdims=True)
    mix = jnp.sum(jnp.exp(log_norm) * probs, axis=-1, keepdims=True)
    out_ref[...] = jnp.log(mix + 1e-7)


# ------------------------------ param packing -------------------------------

def pack_params(params):
    """Concatenate the six Linear heads: W_cat (d_in+1, 6K) with a zeroed row
    for the treatment column, b_cat (1, 6K). Head order [pi0|mu0|s0|pi1|mu1|s1]."""
    order = ["pi0", "mu0", "s0", "pi1", "mu1", "s1"]
    w = jnp.concatenate([params[f"w_{n}"] for n in order], axis=1)         # (d_in, 6K)
    w = jnp.concatenate([w, jnp.zeros((1, w.shape[1]), w.dtype)], axis=0)  # + t row
    b = jnp.concatenate([params[f"b_{n}"] for n in order], axis=1)         # (1, 6K)
    return w, b


# -------------------------------- wrappers ----------------------------------

def _prep(inputs, params, tb, compute_dtype):
    B, d_in_p1 = inputs.shape
    k = params["w_pi0"].shape[1]
    w_cat, b_cat = pack_params(params)
    tb = _pick_tile(B) if tb is None else tb
    B_pad = _round_up(B, tb)
    xt = inputs.astype(compute_dtype)
    if B_pad != B:
        xt = jnp.pad(xt, ((0, B_pad - B), (0, 0)))
    return xt, w_cat.astype(compute_dtype), b_cat.astype(jnp.float32), tb, B_pad, d_in_p1, k


def split_gmm_forward(inputs, params, *, tb=None, compute_dtype=jnp.float32):
    """inputs: (B, dim_input + 1); last column is the treatment t.
    Returns (logits, loc, scale) -- the parameterization of the module's
    MixtureSameFamily(Categorical(logits), Normal(loc, scale))."""
    B = inputs.shape[0]
    xt, w_cat, b_cat, tb, B_pad, d_in_p1, k = _prep(inputs, params, tb, compute_dtype)

    row_in = pl.BlockSpec((tb, d_in_p1), lambda i: (i, 0))
    row_out = pl.BlockSpec((tb, 3 * k), lambda i: (i, 0))
    const = lambda r, c: pl.BlockSpec((r, c), lambda i: (0, 0))
    # TODO(synk): for large d_in/d_out, add pipeline_mode=pl.Buffered(1) to the
    # grid-invariant weight/bias specs to avoid double-buffering them in VMEM.

    comb = pl.pallas_call(
        functools.partial(split_gmm_fwd_kernel, d_in=d_in_p1 - 1, k=k),
        out_shape=jax.ShapeDtypeStruct((B_pad, 3 * k), jnp.float32),
        grid_spec=pltpu.PrefetchScalarGridSpec(
            num_scalar_prefetch=0,
            grid=(B_pad // tb,),
            in_specs=[row_in, const(d_in_p1, 6 * k), const(1, 6 * k)],
            out_specs=row_out,
        ),
        compiler_params=pltpu.CompilerParams(dimension_semantics=("parallel",)),
    )(xt, w_cat, b_cat)
    comb = comb[:B]
    return comb[:, :k], comb[:, k:2 * k], comb[:, 2 * k:]


def split_gmm_log_prob(inputs, y, params, *, tb=None, compute_dtype=jnp.float32):
    """Fused forward + MixtureSameFamily.log_prob(y). Returns (B,) log-probs."""
    B = inputs.shape[0]
    xt, w_cat, b_cat, tb, B_pad, d_in_p1, k = _prep(inputs, params, tb, compute_dtype)
    y2 = y.reshape(B, 1).astype(jnp.float32)
    if B_pad != B:
        y2 = jnp.pad(y2, ((0, B_pad - B), (0, 0)))

    row_in = pl.BlockSpec((tb, d_in_p1), lambda i: (i, 0))
    row_1 = pl.BlockSpec((tb, 1), lambda i: (i, 0))
    const = lambda r, c: pl.BlockSpec((r, c), lambda i: (0, 0))

    out = pl.pallas_call(
        functools.partial(split_gmm_logp_kernel, d_in=d_in_p1 - 1, k=k),
        out_shape=jax.ShapeDtypeStruct((B_pad, 1), jnp.float32),
        grid_spec=pltpu.PrefetchScalarGridSpec(
            num_scalar_prefetch=0,
            grid=(B_pad // tb,),
            in_specs=[row_in, row_1, const(d_in_p1, 6 * k), const(1, 6 * k)],
            out_specs=row_1,
        ),
        compiler_params=pltpu.CompilerParams(dimension_semantics=("parallel",)),
    )(xt, y2, w_cat, b_cat)
    return out[:B, 0]


# ------------------------------- references ---------------------------------

def split_gmm_forward_ref(inputs, params, compute_dtype=jnp.float32):
    x = inputs[:, :-1].astype(compute_dtype).astype(jnp.float32)
    t = inputs[:, -1:].astype(jnp.float32)
    lin = lambda w, b: x @ w.astype(compute_dtype).astype(jnp.float32) + b
    logits = (1 - t) * lin(params["w_pi0"], params["b_pi0"]) + t * lin(params["w_pi1"], params["b_pi1"])
    loc = (1 - t) * lin(params["w_mu0"], params["b_mu0"]) + t * lin(params["w_mu1"], params["b_mu1"])
    scale = ((1 - t) * jax.nn.softplus(lin(params["w_s0"], params["b_s0"]))
             + t * jax.nn.softplus(lin(params["w_s1"], params["b_s1"])) + 1e-7)
    return logits, loc, scale


def gmm_log_prob_ref(logits, loc, scale, y):
    # Matches the module's custom MixtureSameFamily.log_prob exactly.
    z = (y - loc) / scale
    log_norm = -0.5 * z * z - jnp.log(scale) - 0.5 * LOG_2PI
    probs = jax.nn.softmax(logits, axis=-1)
    return jnp.log(jnp.sum(jnp.exp(log_norm) * probs, axis=-1) + 1e-7)


# --------------------------------- params -----------------------------------

def init_params(key, dim_input, dim_output):
    # Deterministic init mimicking nn.Linear: U(-1/sqrt(fan_in), 1/sqrt(fan_in)).
    names = ["pi0", "pi1", "mu0", "mu1", "s0", "s1"]
    keys = jax.random.split(key, 2 * len(names))
    bound = 1.0 / jnp.sqrt(dim_input)
    params = {}
    for i, n in enumerate(names):
        params[f"w_{n}"] = jax.random.uniform(keys[2 * i], (dim_input, dim_output),
                                              jnp.float32, -bound, bound)
        params[f"b_{n}"] = jax.random.uniform(keys[2 * i + 1], (1, dim_output),
                                              jnp.float32, -bound, bound)
    return params


if __name__ == "__main__":
    dim_input, dim_output = 16, 8
    batch = 300           # deliberately not a multiple of the tile -> exercises padding

    key = jax.random.PRNGKey(0)
    k_param, k_x, k_t, k_y = jax.random.split(key, 4)
    params = init_params(k_param, dim_input, dim_output)

    x = jax.random.normal(k_x, (batch, dim_input), jnp.float32)
    t = jax.random.bernoulli(k_t, 0.5, (batch, 1)).astype(jnp.float32)
    inputs = jnp.concatenate([x, t], axis=1)          # (300, 17)
    y = jax.random.normal(k_y, (batch, 1), jnp.float32)

    # ---- f32 path -----------------------------------------------------------
    logits, loc, scale = jax.block_until_ready(split_gmm_forward(inputs, params))
    logp = jax.block_until_ready(split_gmm_log_prob(inputs, y, params))

    logits_r, loc_r, scale_r = split_gmm_forward_ref(inputs, params)
    logp_r = gmm_log_prob_ref(logits_r, loc_r, scale_r, y)

    assert jnp.allclose(logits, logits_r, atol=5e-5, rtol=5e-5)
    assert jnp.allclose(loc, loc_r, atol=5e-5, rtol=5e-5)
    assert jnp.allclose(scale, scale_r, atol=5e-5, rtol=5e-5)
    assert jnp.allclose(logp, logp_r, atol=1e-4, rtol=1e-4)

    # ---- bf16-input / f32-accumulate path (v5e/v6e MXU), checked against an
    # identically-quantized reference so the comparison stays tight. ----------
    logits_b, loc_b, scale_b = jax.block_until_ready(
        split_gmm_forward(inputs, params, compute_dtype=jnp.bfloat16))
    logits_br, loc_br, scale_br = split_gmm_forward_ref(inputs, params,
                                                        compute_dtype=jnp.bfloat16)
    assert jnp.allclose(logits_b, logits_br, atol=1e-4, rtol=1e-4)
    assert jnp.allclose(loc_b, loc_br, atol=1e-4, rtol=1e-4)
    assert jnp.allclose(scale_b, scale_br, atol=1e-4, rtol=1e-4)

    print("KERNEL_OK")
</pallas_src>

<mosaic_0001>
module attributes {stable_mosaic.version = 11 : i64} {
  func.func @split_gmm_fwd_kernel(%arg0: i32, %arg1: memref<152x17xf32, #tpu.memory_space<vmem>>, %arg2: memref<17x48xf32, #tpu.memory_space<vmem>>, %arg3: memref<1x48xf32, #tpu.memory_space<vmem>>, %arg4: memref<152x24xf32, #tpu.memory_space<vmem>>) attributes {dimension_semantics = [#tpu.dimension_semantics<parallel>], iteration_bounds = array<i64: 2>, scalar_prefetch = 0 : i64, scratch_operands = 0 : i64, tpu.core_type = #tpu.core_type<tc>, window_params = [{transform_indices = @transform_0, window_bounds = array<i64: 152, 17>}, {pipeline_mode = #tpu.pipeline_mode<synchronous>, transform_indices = @transform_1, window_bounds = array<i64: 17, 48>}, {pipeline_mode = #tpu.pipeline_mode<synchronous>, transform_indices = @transform_2, window_bounds = array<i64: 1, 48>}, {transform_indices = @transform_3, window_bounds = array<i64: 152, 24>}]} {
    %c0 = arith.constant 0 : index
    %c0_0 = arith.constant 0 : index
    %0 = vector.load %arg1[%c0, %c0_0] : memref<152x17xf32, #tpu.memory_space<vmem>>, vector<152x17xf32>
    %1 = vector.extract_strided_slice %0 {offsets = [0, 16], sizes = [152, 1], strides = [1, 1]} : vector<152x17xf32> to vector<152x1xf32>
    %c0_1 = arith.constant 0 : index
    %c0_2 = arith.constant 0 : index
    %2 = vector.load %arg2[%c0_1, %c0_2] : memref<17x48xf32, #tpu.memory_space<vmem>>, vector<17x48xf32>
    %cst = arith.constant dense<0.000000e+00> : vector<152x48xf32>
    %3 = tpu.matmul %0, %2, %cst {dimension_numbers = #tpu.dot_dimension_numbers<[1], [0], [0], [1], [0, 0, 1, 1], [], []>} : vector<152x17xf32>, vector<17x48xf32>, vector<152x48xf32> -> vector<152x48xf32>
    %c0_3 = arith.constant 0 : index
    %c0_4 = arith.constant 0 : index
    %4 = vector.load %arg3[%c0_3, %c0_4] : memref<1x48xf32, #tpu.memory_space<vmem>>, vector<1x48xf32>
    %5 = vector.broadcast %4 : vector<1x48xf32> to vector<152x48xf32>
    %6 = arith.addf %3, %5 : vector<152x48xf32>
    %7 = vector.extract_strided_slice %6 {offsets = [0, 0], sizes = [152, 24], strides = [1, 1]} : vector<152x48xf32> to vector<152x24xf32>
    %8 = vector.extract_strided_slice %6 {offsets = [0, 24], sizes = [152, 24], strides = [1, 1]} : vector<152x48xf32> to vector<152x24xf32>
    %9 = tpu.iota {dimensions = array<i32: 1>} : vector<1x24xi32>
    %c16_i32 = arith.constant 16 : i32
    %10 = vector.broadcast %c16_i32 : i32 to vector<1x24xi32>
    %11 = arith.cmpi sge, %9, %10 : vector<1x24xi32>
    %cst_5 = arith.constant 0.000000e+00 : f32
    %12 = vector.broadcast %cst_5 : f32 to vector<152x24xf32>
    %13 = arith.maximumf %7, %12 : vector<152x24xf32>
    %14 = math.absf %7 : vector<152x24xf32>
    %cst_6 = arith.constant 0.000000e+00 : f32
    %15 = vector.broadcast %cst_6 : f32 to vector<152x24xf32>
    %16 = arith.subf %15, %14 : vector<152x24xf32>
    %17 = math.exp %16 : vector<152x24xf32>
    %18 = math.log1p %17 : vector<152x24xf32>
    %19 = arith.addf %13, %18 : vector<152x24xf32>
    %20 = vector.shape_cast %11 : vector<1x24xi1> to vector<1x24xi1>
    %21 = vector.broadcast %20 : vector<1x24xi1> to vector<152x24xi1>
    %22 = arith.select %21, %19, %7 : vector<152x24xi1>, vector<152x24xf32>
    %cst_7 = arith.constant 0.000000e+00 : f32
    %23 = vector.broadcast %cst_7 : f32 to vector<152x24xf32>
    %24 = arith.maximumf %8, %23 : vector<152x24xf32>
    %25 = math.absf %8 : vector<152x24xf32>
    %cst_8 = arith.constant 0.000000e+00 : f32
    %26 = vector.broadcast %cst_8 : f32 to vector<152x24xf32>
    %27 = arith.subf %26, %25 : vector<152x24xf32>
    %28 = math.exp %27 : vector<152x24xf32>
    %29 = math.log1p %28 : vector<152x24xf32>
    %30 = arith.addf %24, %29 : vector<152x24xf32>
    %31 = vector.shape_cast %11 : vector<1x24xi1> to vector<1x24xi1>
    %32 = vector.broadcast %31 : vector<1x24xi1> to vector<152x24xi1>
    %33 = arith.select %32, %30, %8 : vector<152x24xi1>, vector<152x24xf32>
    %cst_9 = arith.constant 1.000000e+00 : f32
    %34 = vector.broadcast %cst_9 : f32 to vector<152x1xf32>
    %35 = arith.subf %34, %1 : vector<152x1xf32>
    %36 = vector.broadcast %35 : vector<152x1xf32> to vector<152x24xf32>
    %37 = arith.mulf %36, %22 : vector<152x24xf32>
    %38 = vector.broadcast %1 : vector<152x1xf32> to vector<152x24xf32>
    %39 = arith.mulf %38, %33 : vector<152x24xf32>
    %40 = arith.addf %37, %39 : vector<152x24xf32>
    %cst_10 = arith.constant 1.000000e-07 : f32
    %cst_11 = arith.constant 0.000000e+00 : f32
    %41 = vector.broadcast %cst_10 : f32 to vector<1x24xf32>
    %42 = vector.broadcast %cst_11 : f32 to vector<1x24xf32>
    %43 = arith.select %11, %41, %42 : vector<1x24xi1>, vector<1x24xf32>
    %44 = vector.broadcast %43 : vector<1x24xf32> to vector<152x24xf32>
    %45 = arith.addf %40, %44 : vector<152x24xf32>
    %c0_12 = arith.constant 0 : index
    %c0_13 = arith.constant 0 : index
    %46 = vector.load %arg4[%c0_12, %c0_13] : memref<152x24xf32, #tpu.memory_space<vmem>>, vector<152x24xf32>
    tpu.vector_store %arg4[%c0_12, %c0_13], %45 {strides = array<i32>} : memref<152x24xf32, #tpu.memory_space<vmem>>, vector<152x24xf32>,
    return
  }
  func.func @transform_0(%arg0: i32) -> (i32, i32) {
    %c0_i32 = arith.constant 0 : i32
    %c0_i32_0 = arith.constant 0 : i32
    return %arg0, %c0_i32 : i32, i32
  }
  func.func @transform_1(%arg0: i32) -> (i32, i32) {
    %c0_i32 = arith.constant 0 : i32
    %c0_i32_0 = arith.constant 0 : i32
    %c0_i32_1 = arith.constant 0 : i32
    return %c0_i32, %c0_i32_0 : i32, i32
  }
  func.func @transform_2(%arg0: i32) -> (i32, i32) {
    %c0_i32 = arith.constant 0 : i32
    %c0_i32_0 = arith.constant 0 : i32
    %c0_i32_1 = arith.constant 0 : i32
    return %c0_i32, %c0_i32_0 : i32, i32
  }
  func.func @transform_3(%arg0: i32) -> (i32, i32) {
    %c0_i32 = arith.constant 0 : i32
    %c0_i32_0 = arith.constant 0 : i32
    return %arg0, %c0_i32 : i32, i32
  }
}

</mosaic_0001>

<llo_original>
// kernel: tpu_custom_call.1
$region0: #{tpu_custom_call.1}
  #allocation0 [shape = 'u32[]', space=smem, size = 0x4, offset = 0x4, fixed_abs, tag = 'smem constant byte address 0x4 - core index']
  #allocation1 [shape = 'u32[72,128]{1,0:T(1,128)}', space=vmem, size = 0x9000, scoped, tag = 'internal scratch']
  %s0 = inlined_call_operand.vmem [shape: f32[304,17], index: 0, kind: input, shape index: {}]
  %s1 = inlined_call_operand.vmem [shape: f32[17,48], index: 1, kind: input, shape index: {}]
  %s2 = inlined_call_operand.vmem [shape: f32[1,48], index: 2, kind: input, shape index: {}]
  %s3 = inlined_call_operand.vmem [shape: f32[304,24], index: 3, kind: output, shape index: {}]
  %s4 = sld [smem:[#allocation0]]
  $region45: #{tpu_custom_call.1} parent=0
    _
  %s6 = ssub.s32 1, %s4
  %s7 = scalar_select 0, %s6, %s4
  loop: start=0, step=1, limit=4
  $region2: #{tpu_custom_call.1} parent=0 // loop_pre_header
    _
  $region3: #{tpu_custom_call.1} parent=0 // loop_header
    %s9 = sphi 0, %s13
    %p10 = scmp.ge.s32.totalorder %s9, 4
    %s19 = sphi 0, %s21
    %s22 = sphi 0, %s19
    %s23 = sphi 0, %s22
    %s39 = sphi 0, %s23
    %s43 = sphi 0, %s43
    %s45 = sphi 0, %s43
    %s46 = sphi 0, %s45
    %s60 = sphi 0, %s46
    %s64 = sphi 0, %s64
    %s66 = sphi 0, %s64
    %s67 = sphi 0, %s66
    %s81 = sphi 0, %s67
    %s87 = sphi 0, %s89
    %s90 = sphi 0, %s87
    %s91 = sphi 0, %s90
    %s107 = sphi 0, %s91
  $region4: #{tpu_custom_call.1} parent=0 // loop_header_branch
    %12 = sbr.rel (%p10) target = $region8
  $region5: #{tpu_custom_call.1} parent=0 // loop_body
    %s14 = ssub.s32 %s9, 1
    %s15 = ssub.s32 %s9, 2
    %s16 = sadd.s32 %s9, 1
    %s17 = ssub.s32 %s9, %s16
    %p18 = scmp.eq.s32.totalorder %s17, 0
    %s20 = sadd.s32 %s19, 1
    %s21 = scalar_select %p18, %s19, %s20
    %p24 = pneg %p18
    %p25 = scmp.eq.s32.totalorder %s9, 1
    %p26 = por %p24, %p25
    %p27 = scmp.ne.s32.totalorder %s19, %s22
    %p28 = scmp.eq.s32.totalorder %s9, 0
    %p29 = por %p27, %p28
    %p30 = scmp.ne.s32.totalorder %s19, %s22
    %p31 = scmp.eq.s32.totalorder %s14, 1
    %p32 = por %p30, %p31
    %p33 = scmp.ne.s32.totalorder %s22, %s23
    %p34 = scmp.eq.s32.totalorder %s14, 0
    %p35 = por %p33, %p34
    %p36 = scmp.ne.s32.totalorder %s22, %s23
    %p37 = scmp.eq.s32.totalorder %s15, 1
    %p38 = por %p36, %p37
    %p40 = scmp.ne.s32.totalorder %s23, %s39
    %p41 = scmp.eq.s32.totalorder %s15, 0
    %p42 = por %p40, %p41
    %s44 = sadd.s32 %s43, 1
    %p47 = scmp.eq.s32.totalorder %s9, 1
    %p48 = scmp.ne.s32.totalorder %s43, %s45
    %p49 = scmp.eq.s32.totalorder %s9, 0
    %p50 = por %p48, %p49
    %p51 = scmp.ne.s32.totalorder %s43, %s45
    %p52 = scmp.eq.s32.totalorder %s14, 1
    %p53 = por %p51, %p52
    %p54 = scmp.ne.s32.totalorder %s45, %s46
    %p55 = scmp.eq.s32.totalorder %s14, 0
    %p56 = por %p54, %p55
    %p57 = scmp.ne.s32.totalorder %s45, %s46
    %p58 = scmp.eq.s32.totalorder %s15, 1
    %p59 = por %p57, %p58
    %p61 = scmp.ne.s32.totalorder %s46, %s60
    %p62 = scmp.eq.s32.totalorder %s15, 0
    %p63 = por %p61, %p62
    %s65 = sadd.s32 %s64, 1
    %p68 = scmp.eq.s32.totalorder %s9, 1
    %p69 = scmp.ne.s32.totalorder %s64, %s66
    %p70 = scmp.eq.s32.totalorder %s9, 0
    %p71 = por %p69, %p70
    %p72 = scmp.ne.s32.totalorder %s64, %s66
    %p73 = scmp.eq.s32.totalorder %s14, 1
    %p74 = por %p72, %p73
    %p75 = scmp.ne.s32.totalorder %s66, %s67
    %p76 = scmp.eq.s32.totalorder %s14, 0
    %p77 = por %p75, %p76
    %p78 = scmp.ne.s32.totalorder %s66, %s67
    %p79 = scmp.eq.s32.totalorder %s15, 1
    %p80 = por %p78, %p79
    %p82 = scmp.ne.s32.totalorder %s67, %s81
    %p83 = scmp.eq.s32.totalorder %s15, 0
    %p84 = por %p82, %p83
    %s85 = ssub.s32 %s9, %s16
    %p86 = scmp.eq.s32.totalorder %s85, 0
    %s88 = sadd.s32 %s87, 1
    %s89 = scalar_select %p86, %s87, %s88
    %p92 = pneg %p86
    %p93 = scmp.eq.s32.totalorder %s9, 1
    %p94 = por %p92, %p93
    %p95 = scmp.ne.s32.totalorder %s87, %s90
    %p96 = scmp.eq.s32.totalorder %s9, 0
    %p97 = por %p95, %p96
    %p98 = scmp.ne.s32.totalorder %s87, %s90
    %p99 = scmp.eq.s32.totalorder %s14, 1
    %p100 = por %p98, %p99
    %p101 = scmp.ne.s32.totalorder %s90, %s91
    %p102 = scmp.eq.s32.totalorder %s14, 0
    %p103 = por %p101, %p102
    %p104 = scmp.ne.s32.totalorder %s90, %s91
    %p105 = scmp.eq.s32.totalorder %s15, 1
    %p106 = por %p104, %p105
    %p108 = scmp.ne.s32.totalorder %s91, %s107
    %p109 = scmp.eq.s32.totalorder %s15, 0
    %p110 = por %p108, %p109
    %p111 = scmp.le.s32.totalorder 1, %s9
    %p112 = scmp.lt.s32.totalorder %s9, 3
    %p113 = pnand %p111, %p112
    %p114 = pneg %p113
    // Predicated region
    $region9: #{tpu_custom_call.1} parent=5 // pred_check
      _
    $region10: #{tpu_custom_call.1} parent=5 // pred_check_branch
      %116 = sbr.rel (%p113) target = $region12
    $region11: #{tpu_custom_call.1} parent=5 // pred_region
      %s117 = ssub.s32 %s9, 1
      // Predicated region
      $region13: #{tpu_custom_call.1} parent=11 // pred_check
        %p118 = pneg %p56
      $region14: #{tpu_custom_call.1} parent=11 // pred_check_branch
        %120 = sbr.rel (%p118) target = $region16
      $region15: #{tpu_custom_call.1} parent=11 // pred_region
        _
      $region16: #{tpu_custom_call.1} parent=11 // pred_fallthru
        _
      // Predicated region
      $region17: #{tpu_custom_call.1} parent=11 // pred_check
        %p121 = pneg %p77
      $region18: #{tpu_custom_call.1} parent=11 // pred_check_branch
        %123 = sbr.rel (%p121) target = $region20
      $region19: #{tpu_custom_call.1} parent=11 // pred_region
        _
      $region20: #{tpu_custom_call.1} parent=11 // pred_fallthru
        _
    $region12: #{tpu_custom_call.1} parent=5 // pred_fallthru
      _
    %p124 = scmp.lt.s32.totalorder %s9, 2
    // Predicated region
    $region21: #{tpu_custom_call.1} parent=5 // pred_check
      %p125 = pneg %p124
    $region22: #{tpu_custom_call.1} parent=5 // pred_check_branch
      %127 = sbr.rel (%p125) target = $region24
    $region23: #{tpu_custom_call.1} parent=5 // pred_region
      // Predicated region
      $region25: #{tpu_custom_call.1} parent=23 // pred_check
        %p128 = pneg %p29
      $region26: #{tpu_custom_call.1} parent=23 // pred_check_branch
        %130 = sbr.rel (%p128) target = $region28
      $region27: #{tpu_custom_call.1} parent=23 // pred_region
        %s131 = smul.u32 19, %s9
        %p132 = scmp.lt.s32.totalorder %s131, 37
        %s133 = scalar_select %p132, %s131, 37
        %s134 = smul.addr %s133, 8
        %s135 = scalar_lea.vmem %s0, %s134
        %s136 = smul.u32 19, %s9
      $region28: #{tpu_custom_call.1} parent=23 // pred_fallthru
        _
    $region24: #{tpu_custom_call.1} parent=5 // pred_fallthru
      _
    %p137 = scmp.le.s32.totalorder 1, %s9
    %p138 = scmp.lt.s32.totalorder %s9, 3
    %p139 = pnand %p137, %p138
    %p140 = pneg %p139
    // Predicated region
    $region29: #{tpu_custom_call.1} parent=5 // pred_check
      _
    $region30: #{tpu_custom_call.1} parent=5 // pred_check_branch
      %142 = sbr.rel (%p139) target = $region32
    $region31: #{tpu_custom_call.1} parent=5 // pred_region
      %s143 = ssub.s32 %s9, 1
      %s144 = smul.u32 19, %s14
      %p145 = scmp.lt.s32.totalorder %s144, 37
      %s146 = scalar_select %p145, %s144, 37
      %s147 = smul.addr %s146, 8
      %s148 = scalar_lea.vmem %s0, %s147
      %p149 = pneg %p35
      %p150 = pneg %p32
      %p151 = pneg %p56
      %p152 = pneg %p53
      %p153 = pneg %p77
      %p154 = pneg %p74
      %p155 = pneg %p103
      %p156 = pneg %p100
      %s157 = smul.u32 19, %s14
      %p158 = scmp.lt.s32.totalorder %s157, 37
      %s159 = scalar_select %p158, %s157, 37
      %s160 = smul.addr %s159, 8
      %s161 = scalar_lea.vmem %s3, %s160
      %s162 = smul.u32 19, %s14
      %p163 = scmp.lt.s32.totalorder %s162, 37
      %s164 = scalar_select %p163, %s162, 37
      %s165 = smul.addr %s164, 8
      %s166 = scalar_lea.vmem %s0, %s165
      %s167 = smul.u32 19, %s14
      %s168 = smul.u32 19, %s14
      %p169 = scmp.lt.s32.totalorder %s168, 37
      %s170 = scalar_select %p169, %s168, 37
      %s171 = smul.addr %s170, 8
      %s172 = scalar_lea.vmem %s3, %s171
      %s173 = smul.u32 19, %s14
      %v174 = vld [vmem:[%s166] sm:$0xff]
      %v175 = vld [vmem:[%s166 + $0x8] sm:$0xff]
      %v176 = vld [vmem:[%s166 + $0x10] sm:$0xff]
      %v177 = vld [vmem:[%s166 + $0x18] sm:$0xff]
      %v178 = vld [vmem:[%s166 + $0x20] sm:$0xff]
      %v179 = vld [vmem:[%s166 + $0x28] sm:$0xff]
      %v180 = vld [vmem:[%s166 + $0x30] sm:$0xff]
      %v181 = vld [vmem:[%s166 + $0x38] sm:$0xff]
      %v182 = vld [vmem:[%s166 + $0x40] sm:$0xff]
      %v183 = vld [vmem:[%s166 + $0x48] sm:$0xff]
      %v184 = vld [vmem:[%s166 + $0x50] sm:$0xff]
      %v185 = vld [vmem:[%s166 + $0x58] sm:$0xff]
      %v186 = vld [vmem:[%s166 + $0x60] sm:$0xff]
      %v187 = vld [vmem:[%s166 + $0x68] sm:$0xff]
      %v188 = vld [vmem:[%s166 + $0x70] sm:$0xff]
      %v189 = vld [vmem:[%s166 + $0x78] sm:$0xff]
      %v190 = vld [vmem:[%s166 + $0x80] sm:$0xff]
      %v191 = vld [vmem:[%s166 + $0x88] sm:$0xff]
      %v192 = vld [vmem:[%s166 + $0x90] sm:$0xff]
      %v193 = vld [vmem:[%s1] sm:$0xff]
      %v194 = vld [vmem:[%s1 + $0x8] sm:$0xff]
      %v195 = vld [vmem:[%s1 + $0x10] sm:$0x1]
      %v196 = vld [vmem:[%s2] sm:$0x1]
      %v198 = vperm.slane %v196, 0
      %vm200 = vcmask 138240
      %v202 = vsel %vm200, %v174, 0
      %v205 = vsel %vm200, %v175, 0
      %v208 = vsel %vm200, %v176, 0
      %v211 = vsel %vm200, %v177, 0
      %v214 = vsel %vm200, %v178, 0
      %v217 = vsel %vm200, %v179, 0
      %v220 = vsel %vm200, %v180, 0
      %v223 = vsel %vm200, %v181, 0
      %v226 = vsel %vm200, %v182, 0
      %v229 = vsel %vm200, %v183, 0
      %v232 = vsel %vm200, %v184, 0
      %v235 = vsel %vm200, %v185, 0
      %v238 = vsel %vm200, %v186, 0
      %v241 = vsel %vm200, %v187, 0
      %v244 = vsel %vm200, %v188, 0
      %v247 = vsel %vm200, %v189, 0
      %v250 = vsel %vm200, %v190, 0
      %v253 = vsel %vm200, %v191, 0
      %v256 = vsel %vm200, %v192, 0
      %vm258 = vcmask 1040384
      %v260 = vsel %vm258, %v195, 0
      %262 = vmatpush.msra.mxu0 0.0
      %263 = vmatpush.msra.mxu0 0.0
      %264 = vmatpush.msra.mxu0 0.0
      %265 = vmatpush.msra.mxu0 0.0
      %266 = vmatpush.msra.mxu0 0.0
      %267 = vmatpush.msra.mxu0 0.0
      %268 = vmatpush.msra.mxu0 0.0
      %269 = vmatpush.msra.mxu0 0.0
      %270 = vmatpush.msra.mxu0 0.0
      %271 = vmatpush.msra.mxu0 0.0
      %272 = vmatpush.msra.mxu0 0.0
      %273 = vmatpush.msra.mxu0 0.0
      %274 = vmatpush.msra.mxu0 0.0
      %275 = vmatpush.msra.mxu0 %v260
      %276 = vmatpush.msra.mxu0 %v194
      %277 = vmatpush.msra.mxu0 %v193
      %278 = vmatmul.f32.gmra.mxu0 %v202
      %v279 = vpop.f32.mrf.mxu0
      %v280 = vadd.f32 %v198, %v279
      %281 = vmatmul.f32.gmra.mxu0 %v205
      %v282 = vpop.f32.mrf.mxu0
      %v283 = vadd.f32 %v198, %v282
      %284 = vmatmul.f32.gmra.mxu0 %v208
      %v285 = vpop.f32.mrf.mxu0
      %v286 = vadd.f32 %v198, %v285
      %287 = vmatmul.f32.gmra.mxu0 %v211
      %v288 = vpop.f32.mrf.mxu0
      %v289 = vadd.f32 %v198, %v288
      %290 = vmatmul.f32.gmra.mxu0 %v214
      %v291 = vpop.f32.mrf.mxu0
      %v292 = vadd.f32 %v198, %v291
      %293 = vmatmul.f32.gmra.mxu0 %v217
      %v294 = vpop.f32.mrf.mxu0
      %v295 = vadd.f32 %v198, %v294
      %296 = vmatmul.f32.gmra.mxu0 %v220
      %v297 = vpop.f32.mrf.mxu0
      %v298 = vadd.f32 %v198, %v297
      %299 = vmatmul.f32.gmra.mxu0 %v223
      %v300 = vpop.f32.mrf.mxu0
      %v301 = vadd.f32 %v198, %v300
      %302 = vmatmul.f32.gmra.mxu0 %v226
      %v303 = vpop.f32.mrf.mxu0
      %v304 = vadd.f32 %v198, %v303
      %305 = vmatmul.f32.gmra.mxu0 %v229
      %v306 = vpop.f32.mrf.mxu0
      %v307 = vadd.f32 %v198, %v306
      %308 = vmatmul.f32.gmra.mxu0 %v232
      %v309 = vpop.f32.mrf.mxu0
      %v310 = vadd.f32 %v198, %v309
      %311 = vmatmul.f32.gmra.mxu0 %v235
      %v312 = vpop.f32.mrf.mxu0
      %v313 = vadd.f32 %v198, %v312
      %314 = vmatmul.f32.gmra.mxu0 %v238
      %v315 = vpop.f32.mrf.mxu0
      %v316 = vadd.f32 %v198, %v315
      %317 = vmatmul.f32.gmra.mxu0 %v241
      %v318 = vpop.f32.mrf.mxu0
      %v319 = vadd.f32 %v198, %v318
      %320 = vmatmul.f32.gmra.mxu0 %v244
      %v321 = vpop.f32.mrf.mxu0
      %v322 = vadd.f32 %v198, %v321
      %323 = vmatmul.f32.gmra.mxu0 %v247
      %v324 = vpop.f32.mrf.mxu0
      %v325 = vadd.f32 %v198, %v324
      %326 = vmatmul.f32.gmra.mxu0 %v250
      %v327 = vpop.f32.mrf.mxu0
      %v328 = vadd.f32 %v198, %v327
      %329 = vmatmul.f32.gmra.mxu0 %v253
      %v330 = vpop.f32.mrf.mxu0
      %v331 = vadd.f32 %v198, %v330
      %332 = vmatmul.f32.gmra.mxu0 %v256
      %v333 = vpop.f32.mrf.mxu0
      %v334 = vadd.f32 %v198, %v333
      %335 = vdwg.mxu0
      %v336 = vlaneseq
      %v337 = vand.u32 %v336, 127
      %vm338 = vcmp.ge.s32.totalorder %v337, 16
      %v339 = vmax.f32 %v280, 0.0
      %v340 = vmax.f32 %v283, 0.0
      %v341 = vmax.f32 %v286, 0.0
      %v342 = vmax.f32 %v289, 0.0
      %v343 = vmax.f32 %v292, 0.0
      %v344 = vmax.f32 %v295, 0.0
      %v345 = vmax.f32 %v298, 0.0
      %v346 = vmax.f32 %v301, 0.0
      %v347 = vmax.f32 %v304, 0.0
      %v348 = vmax.f32 %v307, 0.0
      %v349 = vmax.f32 %v310, 0.0
      %v350 = vmax.f32 %v313, 0.0
      %v351 = vmax.f32 %v316, 0.0
      %v352 = vmax.f32 %v319, 0.0
      %v353 = vmax.f32 %v322, 0.0
      %v354 = vmax.f32 %v325, 0.0
      %v355 = vmax.f32 %v328, 0.0
      %v356 = vmax.f32 %v331, 0.0
      %v357 = vmax.f32 %v334, 0.0
      %v358 = vand.u32 2147483647, %v280
      %v359 = vand.u32 2147483647, %v283
      %v360 = vand.u32 2147483647, %v286
      %v361 = vand.u32 2147483647, %v289
      %v362 = vand.u32 2147483647, %v292
      %v363 = vand.u32 2147483647, %v295
      %v364 = vand.u32 2147483647, %v298
      %v365 = vand.u32 2147483647, %v301
      %v366 = vand.u32 2147483647, %v304
      %v367 = vand.u32 2147483647, %v307
      %v368 = vand.u32 2147483647, %v310
      %v369 = vand.u32 2147483647, %v313
      %v370 = vand.u32 2147483647, %v316
      %v371 = vand.u32 2147483647, %v319
      %v372 = vand.u32 2147483647, %v322
      %v373 = vand.u32 2147483647, %v325
      %v374 = vand.u32 2147483647, %v328
      %v375 = vand.u32 2147483647, %v331
      %v376 = vand.u32 2147483647, %v334
      %v377 = vsub.f32 0.0, %v358
      %v378 = vsub.f32 0.0, %v359
      %v379 = vsub.f32 0.0, %v360
      %v380 = vsub.f32 0.0, %v361
      %v381 = vsub.f32 0.0, %v362
      %v382 = vsub.f32 0.0, %v363
      %v383 = vsub.f32 0.0, %v364
      %v384 = vsub.f32 0.0, %v365
      %v385 = vsub.f32 0.0, %v366
      %v386 = vsub.f32 0.0, %v367
      %v387 = vsub.f32 0.0, %v368
      %v388 = vsub.f32 0.0, %v369
      %v389 = vsub.f32 0.0, %v370
      %v390 = vsub.f32 0.0, %v371
      %v391 = vsub.f32 0.0, %v372
      %v392 = vsub.f32 0.0, %v373
      %v393 = vsub.f32 0.0, %v374
      %v394 = vsub.f32 0.0, %v375
      %v395 = vsub.f32 0.0, %v376
      %v396 = vmul.f32 %v377, 1.442695
      %v397 = vpow.pop %v396
      %v398 = vmul.f32 %v378, 1.442695
      %v399 = vpow.pop %v398
      %v400 = vmul.f32 %v379, 1.442695
      %v401 = vpow.pop %v400
      %v402 = vmul.f32 %v380, 1.442695
      %v403 = vpow.pop %v402
      %v404 = vmul.f32 %v381, 1.442695
      %v405 = vpow.pop %v404
      %v406 = vmul.f32 %v382, 1.442695
      %v407 = vpow.pop %v406
      %v408 = vmul.f32 %v383, 1.442695
      %v409 = vpow.pop %v408
      %v410 = vmul.f32 %v384, 1.442695
      %v411 = vpow.pop %v410
      %v412 = vmul.f32 %v385, 1.442695
      %v413 = vpow.pop %v412
      %v414 = vmul.f32 %v386, 1.442695
      %v415 = vpow.pop %v414
      %v416 = vmul.f32 %v387, 1.442695
      %v417 = vpow.pop %v416
      %v418 = vmul.f32 %v388, 1.442695
      %v419 = vpow.pop %v418
      %v420 = vmul.f32 %v389, 1.442695
      %v421 = vpow.pop %v420
      %v422 = vmul.f32 %v390, 1.442695
      %v423 = vpow.pop %v422
      %v424 = vmul.f32 %v391, 1.442695
      %v425 = vpow.pop %v424
      %v426 = vmul.f32 %v392, 1.442695
      %v427 = vpow.pop %v426
      %v428 = vmul.f32 %v393, 1.442695
      %v429 = vpow.pop %v428
      %v430 = vmul.f32 %v394, 1.442695
      %v431 = vpow.pop %v430
      %v432 = vmul.f32 %v395, 1.442695
      %v433 = vpow.pop %v432
      %v434 = vadd.f32 %v397, 1.0
      %v435 = vlog2.pop %v434
      %v436 = vmul.f32 %v435, 0.6931472
      %v437 = vmul.f32 -0.5, %v397
      %v438 = vadd.f32 %v437, 1.0
      %v439 = vmul.f32 %v438, %v397
      %v440 = vand.u32 2147483647, %v397
      %vm441 = vcmp.lt.f32.partialorder %v440, 0.0004427343
      %v442 = vsel %vm441, %v439, %v436
      %v443 = vadd.f32 %v399, 1.0
      %v444 = vlog2.pop %v443
      %v445 = vmul.f32 %v444, 0.6931472
      %v446 = vmul.f32 -0.5, %v399
      %v447 = vadd.f32 %v446, 1.0
      %v448 = vmul.f32 %v447, %v399
      %v449 = vand.u32 2147483647, %v399
      %vm450 = vcmp.lt.f32.partialorder %v449, 0.0004427343
      %v451 = vsel %vm450, %v448, %v445
      %v452 = vadd.f32 %v401, 1.0
      %v453 = vlog2.pop %v452
      %v454 = vmul.f32 %v453, 0.6931472
      %v455 = vmul.f32 -0.5, %v401
      %v456 = vadd.f32 %v455, 1.0
      %v457 = vmul.f32 %v456, %v401
      %v458 = vand.u32 2147483647, %v401
      %vm459 = vcmp.lt.f32.partialorder %v458, 0.0004427343
      %v460 = vsel %vm459, %v457, %v454
      %v461 = vadd.f32 %v403, 1.0
      %v462 = vlog2.pop %v461
      %v463 = vmul.f32 %v462, 0.6931472
      %v464 = vmul.f32 -0.5, %v403
      %v465 = vadd.f32 %v464, 1.0
      %v466 = vmul.f32 %v465, %v403
      %v467 = vand.u32 2147483647, %v403
      %vm468 = vcmp.lt.f32.partialorder %v467, 0.0004427343
      %v469 = vsel %vm468, %v466, %v463
      %v470 = vadd.f32 %v405, 1.0
      %v471 = vlog2.pop %v470
      %v472 = vmul.f32 %v471, 0.6931472
      %v473 = vmul.f32 -0.5, %v405
      %v474 = vadd.f32 %v473, 1.0
      %v475 = vmul.f32 %v474, %v405
      %v476 = vand.u32 2147483647, %v405
      %vm477 = vcmp.lt.f32.partialorder %v476, 0.0004427343
      %v478 = vsel %vm477, %v475, %v472
      %v479 = vadd.f32 %v407, 1.0
      %v480 = vlog2.pop %v479
      %v481 = vmul.f32 %v480, 0.6931472
      %v482 = vmul.f32 -0.5, %v407
      %v483 = vadd.f32 %v482, 1.0
      %v484 = vmul.f32 %v483, %v407
      %v485 = vand.u32 2147483647, %v407
      %vm486 = vcmp.lt.f32.partialorder %v485, 0.0004427343
      %v487 = vsel %vm486, %v484, %v481
      %v488 = vadd.f32 %v409, 1.0
      %v489 = vlog2.pop %v488
      %v490 = vmul.f32 %v489, 0.6931472
      %v491 = vmul.f32 -0.5, %v409
      %v492 = vadd.f32 %v491, 1.0
      %v493 = vmul.f32 %v492, %v409
      %v494 = vand.u32 2147483647, %v409
      %vm495 = vcmp.lt.f32.partialorder %v494, 0.0004427343
      %v496 = vsel %vm495, %v493, %v490
      %v497 = vadd.f32 %v411, 1.0
      %v498 = vlog2.pop %v497
      %v499 = vmul.f32 %v498, 0.6931472
      %v500 = vmul.f32 -0.5, %v411
      %v501 = vadd.f32 %v500, 1.0
      %v502 = vmul.f32 %v501, %v411
      %v503 = vand.u32 2147483647, %v411
      %vm504 = vcmp.lt.f32.partialorder %v503, 0.0004427343
      %v505 = vsel %vm504, %v502, %v499
      %v506 = vadd.f32 %v413, 1.0
      %v507 = vlog2.pop %v506
      %v508 = vmul.f32 %v507, 0.6931472
      %v509 = vmul.f32 -0.5, %v413
      %v510 = vadd.f32 %v509, 1.0
      %v511 = vmul.f32 %v510, %v413
      %v512 = vand.u32 2147483647, %v413
      %vm513 = vcmp.lt.f32.partialorder %v512, 0.0004427343
      %v514 = vsel %vm513, %v511, %v508
      %v515 = vadd.f32 %v415, 1.0
      %v516 = vlog2.pop %v515
      %v517 = vmul.f32 %v516, 0.6931472
      %v518 = vmul.f32 -0.5, %v415
      %v519 = vadd.f32 %v518, 1.0
      %v520 = vmul.f32 %v519, %v415
      %v521 = vand.u32 2147483647, %v415
      %vm522 = vcmp.lt.f32.partialorder %v521, 0.0004427343
      %v523 = vsel %vm522, %v520, %v517
      %v524 = vadd.f32 %v417, 1.0
      %v525 = vlog2.pop %v524
      %v526 = vmul.f32 %v525, 0.6931472
      %v527 = vmul.f32 -0.5, %v417
      %v528 = vadd.f32 %v527, 1.0
      %v529 = vmul.f32 %v528, %v417
      %v530 = vand.u32 2147483647, %v417
      %vm531 = vcmp.lt.f32.partialorder %v530, 0.0004427343
      %v532 = vsel %vm531, %v529, %v526
      %v533 = vadd.f32 %v419, 1.0
      %v534 = vlog2.pop %v533
      %v535 = vmul.f32 %v534, 0.6931472
      %v536 = vmul.f32 -0.5, %v419
      %v537 = vadd.f32 %v536, 1.0
      %v538 = vmul.f32 %v537, %v419
      %v539 = vand.u32 2147483647, %v419
      %vm540 = vcmp.lt.f32.partialorder %v539, 0.0004427343
      %v541 = vsel %vm540, %v538, %v535
      %v542 = vadd.f32 %v421, 1.0
      %v543 = vlog2.pop %v542
      %v544 = vmul.f32 %v543, 0.6931472
      %v545 = vmul.f32 -0.5, %v421
      %v546 = vadd.f32 %v545, 1.0
      %v547 = vmul.f32 %v546, %v421
      %v548 = vand.u32 2147483647, %v421
      %vm549 = vcmp.lt.f32.partialorder %v548, 0.0004427343
      %v550 = vsel %vm549, %v547, %v544
      %v551 = vadd.f32 %v423, 1.0
      %v552 = vlog2.pop %v551
      %v553 = vmul.f32 %v552, 0.6931472
      %v554 = vmul.f32 -0.5, %v423
      %v555 = vadd.f32 %v554, 1.0
      %v556 = vmul.f32 %v555, %v423
      %v557 = vand.u32 2147483647, %v423
      %vm558 = vcmp.lt.f32.partialorder %v557, 0.0004427343
      %v559 = vsel %vm558, %v556, %v553
      %v560 = vadd.f32 %v425, 1.0
      %v561 = vlog2.pop %v560
      %v562 = vmul.f32 %v561, 0.6931472
      %v563 = vmul.f32 -0.5, %v425
      %v564 = vadd.f32 %v563, 1.0
      %v565 = vmul.f32 %v564, %v425
      %v566 = vand.u32 2147483647, %v425
      %vm567 = vcmp.lt.f32.partialorder %v566, 0.0004427343
      %v568 = vsel %vm567, %v565, %v562
      %v569 = vadd.f32 %v427, 1.0
      %v570 = vlog2.pop %v569
      %v571 = vmul.f32 %v570, 0.6931472
      %v572 = vmul.f32 -0.5, %v427
      %v573 = vadd.f32 %v572, 1.0
      %v574 = vmul.f32 %v573, %v427
      %v575 = vand.u32 2147483647, %v427
      %vm576 = vcmp.lt.f32.partialorder %v575, 0.0004427343
      %v577 = vsel %vm576, %v574, %v571
      %v578 = vadd.f32 %v429, 1.0
      %v579 = vlog2.pop %v578
      %v580 = vmul.f32 %v579, 0.6931472
      %v581 = vmul.f32 -0.5, %v429
      %v582 = vadd.f32 %v581, 1.0
      %v583 = vmul.f32 %v582, %v429
      %v584 = vand.u32 2147483647, %v429
      %vm585 = vcmp.lt.f32.partialorder %v584, 0.0004427343
      %v586 = vsel %vm585, %v583, %v580
      %v587 = vadd.f32 %v431, 1.0
      %v588 = vlog2.pop %v587
      %v589 = vmul.f32 %v588, 0.6931472
      %v590 = vmul.f32 -0.5, %v431
      %v591 = vadd.f32 %v590, 1.0
      %v592 = vmul.f32 %v591, %v431
      %v593 = vand.u32 2147483647, %v431
      %vm594 = vcmp.lt.f32.partialorder %v593, 0.0004427343
      %v595 = vsel %vm594, %v592, %v589
      %v596 = vadd.f32 %v433, 1.0
      %v597 = vlog2.pop %v596
      %v598 = vmul.f32 %v597, 0.6931472
      %v599 = vmul.f32 -0.5, %v433
      %v600 = vadd.f32 %v599, 1.0
      %v601 = vmul.f32 %v600, %v433
      %v602 = vand.u32 2147483647, %v433
      %vm603 = vcmp.lt.f32.partialorder %v602, 0.0004427343
      %v604 = vsel %vm603, %v601, %v598
      %v605 = vadd.f32 %v339, %v442
      %v606 = vadd.f32 %v340, %v451
      %v607 = vadd.f32 %v341, %v460
      %v608 = vadd.f32 %v342, %v469
      %v609 = vadd.f32 %v343, %v478
      %v610 = vadd.f32 %v344, %v487
      %v611 = vadd.f32 %v345, %v496
      %v612 = vadd.f32 %v346, %v505
      %v613 = vadd.f32 %v347, %v514
      %v614 = vadd.f32 %v348, %v523
      %v615 = vadd.f32 %v349, %v532
      %v616 = vadd.f32 %v350, %v541
      %v617 = vadd.f32 %v351, %v550
      %v618 = vadd.f32 %v352, %v559
      %v619 = vadd.f32 %v353, %v568
      %v620 = vadd.f32 %v354, %v577
      %v621 = vadd.f32 %v355, %v586
      %v622 = vadd.f32 %v356, %v595
      %v623 = vadd.f32 %v357, %v604
      %v624 = vsel %vm338, 1, 0
      %vm625 = vcmp.eq.s32.totalorder %v624, 1
      %v626 = vsel %vm625, %v605, %v280
      %v627 = vsel %vm625, %v606, %v283
      %v628 = vsel %vm625, %v607, %v286
      %v629 = vsel %vm625, %v608, %v289
      %v630 = vsel %vm625, %v609, %v292
      %v631 = vsel %vm625, %v610, %v295
      %v632 = vsel %vm625, %v611, %v298
      %v633 = vsel %vm625, %v612, %v301
      %v634 = vsel %vm625, %v613, %v304
      %v635 = vsel %vm625, %v614, %v307
      %v636 = vsel %vm625, %v615, %v310
      %v637 = vsel %vm625, %v616, %v313
      %v638 = vsel %vm625, %v617, %v316
      %v639 = vsel %vm625, %v618, %v319
      %v640 = vsel %vm625, %v619, %v322
      %v641 = vsel %vm625, %v620, %v325
      %v642 = vsel %vm625, %v621, %v328
      %v643 = vsel %vm625, %v622, %v331
      %v644 = vsel %vm625, %v623, %v334
      %664 = vrot.lane.b32.xlu0 %v605, 104
      %v665 = vpop.permute.xlu0 %664
      %666 = vrot.lane.b32.xlu0 %v606, 104
      %v667 = vpop.permute.xlu0 %666
      %668 = vrot.lane.b32.xlu0 %v607, 104
      %v669 = vpop.permute.xlu0 %668
      %670 = vrot.lane.b32.xlu0 %v608, 104
      %v671 = vpop.permute.xlu0 %670
      %672 = vrot.lane.b32.xlu0 %v609, 104
      %v673 = vpop.permute.xlu0 %672
      %674 = vrot.lane.b32.xlu0 %v610, 104
      %v675 = vpop.permute.xlu0 %674
      %676 = vrot.lane.b32.xlu0 %v611, 104
      %v677 = vpop.permute.xlu0 %676
      %678 = vrot.lane.b32.xlu0 %v612, 104
      %v679 = vpop.permute.xlu0 %678
      %680 = vrot.lane.b32.xlu0 %v613, 104
      %v681 = vpop.permute.xlu0 %680
      %682 = vrot.lane.b32.xlu0 %v614, 104
      %v683 = vpop.permute.xlu0 %682
      %684 = vrot.lane.b32.xlu0 %v615, 104
      %v685 = vpop.permute.xlu0 %684
      %686 = vrot.lane.b32.xlu0 %v616, 104
      %v687 = vpop.permute.xlu0 %686
      %688 = vrot.lane.b32.xlu0 %v617, 104
      %v689 = vpop.permute.xlu0 %688
      %690 = vrot.lane.b32.xlu0 %v618, 104
      %v691 = vpop.permute.xlu0 %690
      %692 = vrot.lane.b32.xlu0 %v619, 104
      %v693 = vpop.permute.xlu0 %692
      %694 = vrot.lane.b32.xlu0 %v620, 104
      %v695 = vpop.permute.xlu0 %694
      %696 = vrot.lane.b32.xlu0 %v621, 104
      %v697 = vpop.permute.xlu0 %696
      %698 = vrot.lane.b32.xlu0 %v622, 104
      %v699 = vpop.permute.xlu0 %698
      %700 = vrot.lane.b32.xlu0 %v623, 104
      %v701 = vpop.permute.xlu0 %700
      %740 = vrot.lane.b32.xlu0 %v280, 104
      %v741 = vpop.permute.xlu0 %740
      %742 = vrot.lane.b32.xlu0 %v283, 104
      %v743 = vpop.permute.xlu0 %742
      %744 = vrot.lane.b32.xlu0 %v286, 104
      %v745 = vpop.permute.xlu0 %744
      %746 = vrot.lane.b32.xlu0 %v289, 104
      %v747 = vpop.permute.xlu0 %746
      %748 = vrot.lane.b32.xlu0 %v292, 104
      %v749 = vpop.permute.xlu0 %748
      %750 = vrot.lane.b32.xlu0 %v295, 104
      %v751 = vpop.permute.xlu0 %750
      %752 = vrot.lane.b32.xlu0 %v298, 104
      %v753 = vpop.permute.xlu0 %752
      %754 = vrot.lane.b32.xlu0 %v301, 104
      %v755 = vpop.permute.xlu0 %754
      %756 = vrot.lane.b32.xlu0 %v304, 104
      %v757 = vpop.permute.xlu0 %756
      %758 = vrot.lane.b32.xlu0 %v307, 104
      %v759 = vpop.permute.xlu0 %758
      %760 = vrot.lane.b32.xlu0 %v310, 104
      %v761 = vpop.permute.xlu0 %760
      %762 = vrot.lane.b32.xlu0 %v313, 104
      %v763 = vpop.permute.xlu0 %762
      %764 = vrot.lane.b32.xlu0 %v316, 104
      %v765 = vpop.permute.xlu0 %764
      %766 = vrot.lane.b32.xlu0 %v319, 104
      %v767 = vpop.permute.xlu0 %766
      %768 = vrot.lane.b32.xlu0 %v322, 104
      %v769 = vpop.permute.xlu0 %768
      %770 = vrot.lane.b32.xlu0 %v325, 104
      %v771 = vpop.permute.xlu0 %770
      %772 = vrot.lane.b32.xlu0 %v328, 104
      %v773 = vpop.permute.xlu0 %772
      %774 = vrot.lane.b32.xlu0 %v331, 104
      %v775 = vpop.permute.xlu0 %774
      %776 = vrot.lane.b32.xlu0 %v334, 104
      %v777 = vpop.permute.xlu0 %776
      %v797 = vsel %vm625, %v665, %v741
      %v798 = vsel %vm625, %v667, %v743
      %v799 = vsel %vm625, %v669, %v745
      %v800 = vsel %vm625, %v671, %v747
      %v801 = vsel %vm625, %v673, %v749
      %v802 = vsel %vm625, %v675, %v751
      %v803 = vsel %vm625, %v677, %v753
      %v804 = vsel %vm625, %v679, %v755
      %v805 = vsel %vm625, %v681, %v757
      %v806 = vsel %vm625, %v683, %v759
      %v807 = vsel %vm625, %v685, %v761
      %v808 = vsel %vm625, %v687, %v763
      %v809 = vsel %vm625, %v689, %v765
      %v810 = vsel %vm625, %v691, %v767
      %v811 = vsel %vm625, %v693, %v769
      %v812 = vsel %vm625, %v695, %v771
      %v813 = vsel %vm625, %v697, %v773
      %v814 = vsel %vm625, %v699, %v775
      %v815 = vsel %vm625, %v701, %v777
      %v816 = vsub.f32 1.0, %v174
      %v817 = vsub.f32 1.0, %v175
      %v818 = vsub.f32 1.0, %v176
      %v819 = vsub.f32 1.0, %v177
      %v820 = vsub.f32 1.0, %v178
      %v821 = vsub.f32 1.0, %v179
      %v822 = vsub.f32 1.0, %v180
      %v823 = vsub.f32 1.0, %v181
      %v824 = vsub.f32 1.0, %v182
      %v825 = vsub.f32 1.0, %v183
      %v826 = vsub.f32 1.0, %v184
      %v827 = vsub.f32 1.0, %v185
      %v828 = vsub.f32 1.0, %v186
      %v829 = vsub.f32 1.0, %v187
      %v830 = vsub.f32 1.0, %v188
      %v831 = vsub.f32 1.0, %v189
      %v832 = vsub.f32 1.0, %v190
      %v833 = vsub.f32 1.0, %v191
      %v834 = vsub.f32 1.0, %v192
      %836 = vset.pattern.permute.xlu0 16
      %837 = vperm.xlu0 %836, %v816
      %v838 = vpop.permute.xlu0 %837
      %841 = vset.pattern.permute.xlu0 16
      %842 = vperm.xlu0 %841, %v817
      %v843 = vpop.permute.xlu0 %842
      %846 = vset.pattern.permute.xlu0 16
      %847 = vperm.xlu0 %846, %v818
      %v848 = vpop.permute.xlu0 %847
      %851 = vset.pattern.permute.xlu0 16
      %852 = vperm.xlu0 %851, %v819
      %v853 = vpop.permute.xlu0 %852
      %856 = vset.pattern.permute.xlu0 16
      %857 = vperm.xlu0 %856, %v820
      %v858 = vpop.permute.xlu0 %857
      %861 = vset.pattern.permute.xlu0 16
      %862 = vperm.xlu0 %861, %v821
      %v863 = vpop.permute.xlu0 %862
      %866 = vset.pattern.permute.xlu0 16
      %867 = vperm.xlu0 %866, %v822
      %v868 = vpop.permute.xlu0 %867
      %871 = vset.pattern.permute.xlu0 16
      %872 = vperm.xlu0 %871, %v823
      %v873 = vpop.permute.xlu0 %872
      %876 = vset.pattern.permute.xlu0 16
      %877 = vperm.xlu0 %876, %v824
      %v878 = vpop.permute.xlu0 %877
      %881 = vset.pattern.permute.xlu0 16
      %882 = vperm.xlu0 %881, %v825
      %v883 = vpop.permute.xlu0 %882
      %886 = vset.pattern.permute.xlu0 16
      %887 = vperm.xlu0 %886, %v826
      %v888 = vpop.permute.xlu0 %887
      %891 = vset.pattern.permute.xlu0 16
      %892 = vperm.xlu0 %891, %v827
      %v893 = vpop.permute.xlu0 %892
      %896 = vset.pattern.permute.xlu0 16
      %897 = vperm.xlu0 %896, %v828
      %v898 = vpop.permute.xlu0 %897
      %901 = vset.pattern.permute.xlu0 16
      %902 = vperm.xlu0 %901, %v829
      %v903 = vpop.permute.xlu0 %902
      %906 = vset.pattern.permute.xlu0 16
      %907 = vperm.xlu0 %906, %v830
      %v908 = vpop.permute.xlu0 %907
      %911 = vset.pattern.permute.xlu0 16
      %912 = vperm.xlu0 %911, %v831
      %v913 = vpop.permute.xlu0 %912
      %916 = vset.pattern.permute.xlu0 16
      %917 = vperm.xlu0 %916, %v832
      %v918 = vpop.permute.xlu0 %917
      %921 = vset.pattern.permute.xlu0 16
      %922 = vperm.xlu0 %921, %v833
      %v923 = vpop.permute.xlu0 %922
      %926 = vset.pattern.permute.xlu0 16
      %927 = vperm.xlu0 %926, %v834
      %v928 = vpop.permute.xlu0 %927
      %v930 = vmul.f32 %v838, %v626
      %v931 = vmul.f32 %v843, %v627
      %v932 = vmul.f32 %v848, %v628
      %v933 = vmul.f32 %v853, %v629
      %v934 = vmul.f32 %v858, %v630
      %v935 = vmul.f32 %v863, %v631
      %v936 = vmul.f32 %v868, %v632
      %v937 = vmul.f32 %v873, %v633
      %v938 = vmul.f32 %v878, %v634
      %v939 = vmul.f32 %v883, %v635
      %v940 = vmul.f32 %v888, %v636
      %v941 = vmul.f32 %v893, %v637
      %v942 = vmul.f32 %v898, %v638
      %v943 = vmul.f32 %v903, %v639
      %v944 = vmul.f32 %v908, %v640
      %v945 = vmul.f32 %v913, %v641
      %v946 = vmul.f32 %v918, %v642
      %v947 = vmul.f32 %v923, %v643
      %v948 = vmul.f32 %v928, %v644
      %949 = vset.pattern.permute.xlu0 16
      %950 = vperm.xlu0 %949, %v174
      %v951 = vpop.permute.xlu0 %950
      %953 = vset.pattern.permute.xlu0 16
      %954 = vperm.xlu0 %953, %v175
      %v955 = vpop.permute.xlu0 %954
      %957 = vset.pattern.permute.xlu0 16
      %958 = vperm.xlu0 %957, %v176
      %v959 = vpop.permute.xlu0 %958
      %961 = vset.pattern.permute.xlu0 16
      %962 = vperm.xlu0 %961, %v177
      %v963 = vpop.permute.xlu0 %962
      %965 = vset.pattern.permute.xlu0 16
      %966 = vperm.xlu0 %965, %v178
      %v967 = vpop.permute.xlu0 %966
      %969 = vset.pattern.permute.xlu0 16
      %970 = vperm.xlu0 %969, %v179
      %v971 = vpop.permute.xlu0 %970
      %973 = vset.pattern.permute.xlu0 16
      %974 = vperm.xlu0 %973, %v180
      %v975 = vpop.permute.xlu0 %974
      %977 = vset.pattern.permute.xlu0 16
      %978 = vperm.xlu0 %977, %v181
      %v979 = vpop.permute.xlu0 %978
      %981 = vset.pattern.permute.xlu0 16
      %982 = vperm.xlu0 %981, %v182
      %v983 = vpop.permute.xlu0 %982
      %985 = vset.pattern.permute.xlu0 16
      %986 = vperm.xlu0 %985, %v183
      %v987 = vpop.permute.xlu0 %986
      %989 = vset.pattern.permute.xlu0 16
      %990 = vperm.xlu0 %989, %v184
      %v991 = vpop.permute.xlu0 %990
      %993 = vset.pattern.permute.xlu0 16
      %994 = vperm.xlu0 %993, %v185
      %v995 = vpop.permute.xlu0 %994
      %997 = vset.pattern.permute.xlu0 16
      %998 = vperm.xlu0 %997, %v186
      %v999 = vpop.permute.xlu0 %998
      %1001 = vset.pattern.permute.xlu0 16
      %1002 = vperm.xlu0 %1001, %v187
      %v1003 = vpop.permute.xlu0 %1002
      %1005 = vset.pattern.permute.xlu0 16
      %1006 = vperm.xlu0 %1005, %v188
      %v1007 = vpop.permute.xlu0 %1006
      %1009 = vset.pattern.permute.xlu0 16
      %1010 = vperm.xlu0 %1009, %v189
      %v1011 = vpop.permute.xlu0 %1010
      %1013 = vset.pattern.permute.xlu0 16
      %1014 = vperm.xlu0 %1013, %v190
      %v1015 = vpop.permute.xlu0 %1014
      %1017 = vset.pattern.permute.xlu0 16
      %1018 = vperm.xlu0 %1017, %v191
      %v1019 = vpop.permute.xlu0 %1018
      %1021 = vset.pattern.permute.xlu0 16
      %1022 = vperm.xlu0 %1021, %v192
      %v1023 = vpop.permute.xlu0 %1022
      %v1025 = vmul.f32 %v951, %v797
      %v1026 = vmul.f32 %v955, %v798
      %v1027 = vmul.f32 %v959, %v799
      %v1028 = vmul.f32 %v963, %v800
      %v1029 = vmul.f32 %v967, %v801
      %v1030 = vmul.f32 %v971, %v802
      %v1031 = vmul.f32 %v975, %v803
      %v1032 = vmul.f32 %v979, %v804
      %v1033 = vmul.f32 %v983, %v805
      %v1034 = vmul.f32 %v987, %v806
      %v1035 = vmul.f32 %v991, %v807
      %v1036 = vmul.f32 %v995, %v808
      %v1037 = vmul.f32 %v999, %v809
      %v1038 = vmul.f32 %v1003, %v810
      %v1039 = vmul.f32 %v1007, %v811
      %v1040 = vmul.f32 %v1011, %v812
      %v1041 = vmul.f32 %v1015, %v813
      %v1042 = vmul.f32 %v1019, %v814
      %v1043 = vmul.f32 %v1023, %v815
      %v1044 = vadd.f32 %v930, %v1025
      %v1045 = vadd.f32 %v931, %v1026
      %v1046 = vadd.f32 %v932, %v1027
      %v1047 = vadd.f32 %v933, %v1028
      %v1048 = vadd.f32 %v934, %v1029
      %v1049 = vadd.f32 %v935, %v1030
      %v1050 = vadd.f32 %v936, %v1031
      %v1051 = vadd.f32 %v937, %v1032
      %v1052 = vadd.f32 %v938, %v1033
      %v1053 = vadd.f32 %v939, %v1034
      %v1054 = vadd.f32 %v940, %v1035
      %v1055 = vadd.f32 %v941, %v1036
      %v1056 = vadd.f32 %v942, %v1037
      %v1057 = vadd.f32 %v943, %v1038
      %v1058 = vadd.f32 %v944, %v1039
      %v1059 = vadd.f32 %v945, %v1040
      %v1060 = vadd.f32 %v946, %v1041
      %v1061 = vadd.f32 %v947, %v1042
      %v1062 = vadd.f32 %v948, %v1043
      %v1063 = vsel %vm338, 1e-07, 0.0
      %v1064 = vadd.f32 %v1044, %v1063
      %v1065 = vadd.f32 %v1045, %v1063
      %v1066 = vadd.f32 %v1046, %v1063
      %v1067 = vadd.f32 %v1047, %v1063
      %v1068 = vadd.f32 %v1048, %v1063
      %v1069 = vadd.f32 %v1049, %v1063
      %v1070 = vadd.f32 %v1050, %v1063
      %v1071 = vadd.f32 %v1051, %v1063
      %v1072 = vadd.f32 %v1052, %v1063
      %v1073 = vadd.f32 %v1053, %v1063
      %v1074 = vadd.f32 %v1054, %v1063
      %v1075 = vadd.f32 %v1055, %v1063
      %v1076 = vadd.f32 %v1056, %v1063
      %v1077 = vadd.f32 %v1057, %v1063
      %v1078 = vadd.f32 %v1058, %v1063
      %v1079 = vadd.f32 %v1059, %v1063
      %v1080 = vadd.f32 %v1060, %v1063
      %v1081 = vadd.f32 %v1061, %v1063
      %v1082 = vadd.f32 %v1062, %v1063
      %vm1083 = vcmask 195584
      %1084 = vst.msk [vmem:[%s172] sm:$0xff] %vm1083, %v1064
      %1085 = vst.msk [vmem:[%s172 + $0x8] sm:$0xff] %vm1083, %v1065
      %1086 = vst.msk [vmem:[%s172 + $0x10] sm:$0xff] %vm1083, %v1066
      %1087 = vst.msk [vmem:[%s172 + $0x18] sm:$0xff] %vm1083, %v1067
      %1088 = vst.msk [vmem:[%s172 + $0x20] sm:$0xff] %vm1083, %v1068
      %1089 = vst.msk [vmem:[%s172 + $0x28] sm:$0xff] %vm1083, %v1069
      %1090 = vst.msk [vmem:[%s172 + $0x30] sm:$0xff] %vm1083, %v1070
      %1091 = vst.msk [vmem:[%s172 + $0x38] sm:$0xff] %vm1083, %v1071
      %1092 = vst.msk [vmem:[%s172 + $0x40] sm:$0xff] %vm1083, %v1072
      %1093 = vst.msk [vmem:[%s172 + $0x48] sm:$0xff] %vm1083, %v1073
      %1094 = vst.msk [vmem:[%s172 + $0x50] sm:$0xff] %vm1083, %v1074
      %1095 = vst.msk [vmem:[%s172 + $0x58] sm:$0xff] %vm1083, %v1075
      %1096 = vst.msk [vmem:[%s172 + $0x60] sm:$0xff] %vm1083, %v1076
      %1097 = vst.msk [vmem:[%s172 + $0x68] sm:$0xff] %vm1083, %v1077
      %1098 = vst.msk [vmem:[%s172 + $0x70] sm:$0xff] %vm1083, %v1078
      %1099 = vst.msk [vmem:[%s172 + $0x78] sm:$0xff] %vm1083, %v1079
      %1100 = vst.msk [vmem:[%s172 + $0x80] sm:$0xff] %vm1083, %v1080
      %1101 = vst.msk [vmem:[%s172 + $0x88] sm:$0xff] %vm1083, %v1081
      %1102 = vst.msk [vmem:[%s172 + $0x90] sm:$0xff] %vm1083, %v1082
      %s1103 = smul.u32 19, %s14
      %p1104 = scmp.lt.s32.totalorder %s1103, 37
      %s1105 = scalar_select %p1104, %s1103, 37
      %s1106 = smul.addr %s1105, 8
      %s1107 = scalar_lea.vmem %s3, %s1106
      // Predicated region
      $region33: #{tpu_custom_call.1} parent=31 // pred_check
        %p1108 = pneg %p100
      $region34: #{tpu_custom_call.1} parent=31 // pred_check_branch
        %1110 = sbr.rel (%p1108) target = $region36
      $region35: #{tpu_custom_call.1} parent=31 // pred_region
        %s1111 = smul.u32 19, %s14
      $region36: #{tpu_custom_call.1} parent=31 // pred_fallthru
        _
    $region32: #{tpu_custom_call.1} parent=5 // pred_fallthru
      _
    %p1112 = scmp.le.s32.totalorder 2, %s9
    // Predicated region
    $region37: #{tpu_custom_call.1} parent=5 // pred_check
      %p1113 = pneg %p1112
    $region38: #{tpu_custom_call.1} parent=5 // pred_check_branch
      %1115 = sbr.rel (%p1113) target = $region40
    $region39: #{tpu_custom_call.1} parent=5 // pred_region
      %s1116 = ssub.s32 %s9, 2
      // Predicated region
      $region41: #{tpu_custom_call.1} parent=39 // pred_check
        %p1117 = pneg %p106
      $region42: #{tpu_custom_call.1} parent=39 // pred_check_branch
        %1119 = sbr.rel (%p1117) target = $region44
      $region43: #{tpu_custom_call.1} parent=39 // pred_region
        %s1120 = smul.u32 19, %s15
        %p1121 = scmp.lt.s32.totalorder %s1120, 37
        %s1122 = scalar_select %p1121, %s1120, 37
        %s1123 = smul.addr %s1122, 8
        %s1124 = scalar_lea.vmem %s3, %s1123
      $region44: #{tpu_custom_call.1} parent=39 // pred_fallthru
        _
    $region40: #{tpu_custom_call.1} parent=5 // pred_fallthru
      _
  $region6: #{tpu_custom_call.1} parent=0 // loop_footer
    %s13 = sadd.s32 1, %s9
  $region7: #{tpu_custom_call.1} parent=0 // loop_footer_branch
    %8 = sbr.rel target = $region3
  $region8: #{tpu_custom_call.1} parent=0 // loop_exit
    _

</llo_original>
